<compile_context>
chip_gen: v7x
topology: tpu7x:2x2x1
jax: 0.10.0
libtpu: 0.0.40
codegen_flags: <defaults>
</compile_context>

<pallas_src>
import functools
import math

import jax
import jax.numpy as jnp
from jax.experimental import pallas as pl
from jax.experimental.pallas import tpu as pltpu


def _label_smoothing_kernel(x_ref, tgt_ref, out_ref, *,
                            n_rows: int, pad_index: int, confidence: float,
                            smooth_val: float, const_entropy: float):
    x = x_ref[...].astype(jnp.float32)        # (TM, V) log-probs
    tgt = tgt_ref[...]                        # (TM, 1) int32
    tm, v = x.shape

    # Folded weight: smooth_val everywhere, confidence at the target column.
    col = jax.lax.broadcasted_iota(jnp.int32, (tm, v), 1)
    w = jnp.where(col == tgt, jnp.float32(confidence), jnp.float32(smooth_val))

    # cross = sum_v true_dist * x for non-pad rows:
    #   subtract the smooth_val that the fold over-counts at the pad column
    #   (static 1-lane slice, O(TM) work).  Pad rows are zeroed post-reduction.
    cross = jnp.sum(w * x, axis=1, keepdims=True)                     # (TM, 1)
    cross = cross - jnp.float32(smooth_val) * x[:, pad_index:pad_index + 1]

    # Row validity mask (ragged tail of the last block + pad rows), applied
    # AFTER the reduction so undefined tail data (possibly NaN) is discarded.
    row = pl.program_id(0) * tm + jax.lax.broadcasted_iota(jnp.int32, (tm, 1), 0)
    keep = jnp.logical_and(row < n_rows, tgt != pad_index)            # (TM, 1)

    out_ref[...] = jnp.where(keep,
                             jnp.float32(const_entropy) - cross,
                             jnp.float32(0.0))


def _choose_tile_rows(n: int, v: int, itemsize: int, *,
                      budget_bytes: int = 8 << 20) -> int:
    """Row-tile size: dtype-aligned, <= ~budget_bytes per x block, >=2 grid steps
    whenever n allows it (megacore / pipelining)."""
    # Native sublane tiling: f32 -> 8, bf16 -> 16, int8/fp8 -> 32.
    align = max(8, 32 // max(itemsize, 1))
    rows = budget_bytes // max(v * itemsize, 1)
    rows = max(align, (rows // align) * align)
    if n > align:
        # Keep at least 2 grid steps so v7x megacore gets both TensorCores.
        half = ((n + 1) // 2 + align - 1) // align * align
        rows = min(rows, half)
    # Never larger than needed to cover n in one (aligned) tile.
    n_ceil = (n + align - 1) // align * align
    rows = min(rows, n_ceil)
    return max(align, rows)
    # TODO(synk): for very large vocab (V*itemsize per row ~1 MiB) add a second
    # "arbitrary" grid axis over V with a (TM,1) VMEM accumulator instead of
    # shrinking tile_rows to the minimum block.


def label_smoothing_loss(x: jax.Array, target: jax.Array,
                         pad_index: int = 0, smoothing: float = 0.0,
                         tile_rows: int | None = None) -> jax.Array:
    """x: [N, V] log-probs, target: [N] int -> scalar f32 loss (KLDiv, sum)."""
    n, v = x.shape
    assert v > 2, "vocab_size must be > 2 for smoothing/(vocab_size - 2)"
    itemsize = jnp.dtype(x.dtype).itemsize
    align = max(8, 32 // max(itemsize, 1))
    if tile_rows is None:
        tile_rows = _choose_tile_rows(n, v, itemsize)
    else:
        tile_rows = max(align, (tile_rows // align) * align)

    tgt = target.astype(jnp.int32).reshape(n, 1)

    confidence = 1.0 - smoothing
    smooth_val = smoothing / (v - 2)
    const_entropy = 0.0
    if confidence > 0.0:
        const_entropy += confidence * math.log(confidence)
    if smooth_val > 0.0:
        const_entropy += (v - 2) * smooth_val * math.log(smooth_val)

    kernel = functools.partial(
        _label_smoothing_kernel,
        n_rows=n, pad_index=pad_index, confidence=confidence,
        smooth_val=smooth_val, const_entropy=const_entropy)

    num_tiles = pl.cdiv(n, tile_rows)

    per_row = pl.pallas_call(
        kernel,
        out_shape=jax.ShapeDtypeStruct((n, 1), jnp.float32),
        grid_spec=pltpu.PrefetchScalarGridSpec(
            num_scalar_prefetch=0,
            grid=(num_tiles,),
            in_specs=[
                pl.BlockSpec((tile_rows, v), lambda i: (i, 0)),   # x row tile
                pl.BlockSpec((tile_rows, 1), lambda i: (i, 0)),   # target row tile
            ],
            out_specs=pl.BlockSpec((tile_rows, 1), lambda i: (i, 0)),  # per-row loss
        ),
        compiler_params=pltpu.CompilerParams(
            dimension_semantics=("parallel",),    # independent tiles -> megacore OK
            vmem_limit_bytes=40 << 20),           # 64-MiB-aware (v7x) headroom
    )(x, tgt)

    # Final scalar reduce of the per-row partials in plain XLA (tiny).
    return jnp.sum(per_row)


def _reference(x, target, pad_index, smoothing):
    n, v = x.shape
    confidence = 1.0 - smoothing
    td = jnp.full((n, v), smoothing / (v - 2), dtype=jnp.float32)
    td = td.at[jnp.arange(n), target].set(confidence)
    td = td.at[:, pad_index].set(0.0)
    td = jnp.where((target == pad_index)[:, None], 0.0, td)
    x = x.astype(jnp.float32)
    kl = jnp.where(td > 0, td * jnp.log(jnp.where(td > 0, td, 1.0)), 0.0) - td * x
    return jnp.sum(kl)


if __name__ == "__main__":
    key = jax.random.PRNGKey(0)
    k1, k2 = jax.random.split(key)

    # Small shapes; N deliberately NOT a multiple of 8 to exercise the
    # ragged-tail masking path (no jnp.pad copy of x anymore).
    N, V = 13, 256          # num_instances, vocab_size
    PAD_INDEX = 0
    SMOOTHING = 0.1

    # Deterministic synthetic inputs: x are valid log-probs (log_softmax of logits).
    logits = jax.random.normal(k1, (N, V), dtype=jnp.float32)
    x = jax.nn.log_softmax(logits, axis=-1)
    target = jax.random.randint(k2, (N,), 0, V, dtype=jnp.int32)
    target = target.at[3].set(PAD_INDEX)  # include a padded instance

    loss = label_smoothing_loss(x, target, pad_index=PAD_INDEX, smoothing=SMOOTHING)
    loss = jax.block_until_ready(loss)

    ref = _reference(x, target, PAD_INDEX, SMOOTHING)
    assert jnp.allclose(loss, ref, rtol=1e-5, atol=1e-5), (loss, ref)

    # Also check the no-smoothing (pure NLL) edge case on the same kernel.
    loss0 = jax.block_until_ready(
        label_smoothing_loss(x, target, pad_index=PAD_INDEX, smoothing=0.0))
    ref0 = _reference(x, target, PAD_INDEX, 0.0)
    assert jnp.allclose(loss0, ref0, rtol=1e-5, atol=1e-5), (loss0, ref0)

    print("KERNEL_OK")
</pallas_src>

<mosaic_0001>
module attributes {stable_mosaic.version = 11 : i64} {
  func.func @_label_smoothing_kernel(%arg0: i32, %arg1: memref<8x256xf32, #tpu.memory_space<vmem>>, %arg2: memref<8x1xi32, #tpu.memory_space<vmem>>, %arg3: memref<8x1xf32, #tpu.memory_space<vmem>>) attributes {dimension_semantics = [#tpu.dimension_semantics<parallel>], iteration_bounds = array<i64: 2>, scalar_prefetch = 0 : i64, scratch_operands = 0 : i64, tpu.core_type = #tpu.core_type<tc>, window_params = [{transform_indices = @transform_0, window_bounds = array<i64: 8, 256>}, {transform_indices = @transform_1, window_bounds = array<i64: 8, 1>}, {transform_indices = @transform_2, window_bounds = array<i64: 8, 1>}]} {
    %c0 = arith.constant 0 : index
    %c0_0 = arith.constant 0 : index
    %0 = vector.load %arg1[%c0, %c0_0] : memref<8x256xf32, #tpu.memory_space<vmem>>, vector<8x256xf32>
    %c0_1 = arith.constant 0 : index
    %c0_2 = arith.constant 0 : index
    %1 = vector.load %arg2[%c0_1, %c0_2] : memref<8x1xi32, #tpu.memory_space<vmem>>, vector<8x1xi32>
    %2 = tpu.iota {dimensions = array<i32: 1>} : vector<8x256xi32>
    %3 = vector.broadcast %1 : vector<8x1xi32> to vector<8x256xi32>
    %4 = arith.cmpi eq, %2, %3 : vector<8x256xi32>
    %cst = arith.constant 0.899999976 : f32
    %cst_3 = arith.constant 3.93700786E-4 : f32
    %5 = vector.broadcast %cst : f32 to vector<8x256xf32>
    %6 = vector.broadcast %cst_3 : f32 to vector<8x256xf32>
    %7 = arith.select %4, %5, %6 : vector<8x256xi1>, vector<8x256xf32>
    %8 = arith.mulf %7, %0 : vector<8x256xf32>
    %cst_4 = arith.constant dense<0.000000e+00> : vector<8xf32>
    %9 = vector.multi_reduction <add>, %8, %cst_4 [1] : vector<8x256xf32> to vector<8xf32>
    %10 = vector.shape_cast %9 : vector<8xf32> to vector<8x1xf32>
    %11 = vector.extract_strided_slice %0 {offsets = [0, 0], sizes = [8, 1], strides = [1, 1]} : vector<8x256xf32> to vector<8x1xf32>
    %cst_5 = arith.constant 3.93700786E-4 : f32
    %12 = vector.broadcast %cst_5 : f32 to vector<8x1xf32>
    %13 = arith.mulf %12, %11 : vector<8x1xf32>
    %14 = arith.subf %10, %13 : vector<8x1xf32>
    %c8_i32 = arith.constant 8 : i32
    %15 = arith.muli %arg0, %c8_i32 : i32
    %16 = tpu.iota {dimensions = array<i32: 0>} : vector<8x1xi32>
    %17 = vector.broadcast %15 : i32 to vector<8x1xi32>
    %18 = arith.addi %17, %16 : vector<8x1xi32>
    %c13_i32 = arith.constant 13 : i32
    %19 = vector.broadcast %c13_i32 : i32 to vector<8x1xi32>
    %20 = arith.cmpi slt, %18, %19 : vector<8x1xi32>
    %c0_i32 = arith.constant 0 : i32
    %21 = vector.broadcast %c0_i32 : i32 to vector<8x1xi32>
    %22 = arith.cmpi ne, %1, %21 : vector<8x1xi32>
    %23 = arith.andi %20, %22 : vector<8x1xi1>
    %cst_6 = arith.constant -0.878816425 : f32
    %24 = vector.broadcast %cst_6 : f32 to vector<8x1xf32>
    %25 = arith.subf %24, %14 : vector<8x1xf32>
    %cst_7 = arith.constant 0.000000e+00 : f32
    %26 = vector.broadcast %cst_7 : f32 to vector<8x1xf32>
    %27 = arith.select %23, %25, %26 : vector<8x1xi1>, vector<8x1xf32>
    %c0_8 = arith.constant 0 : index
    %c0_9 = arith.constant 0 : index
    %28 = vector.load %arg3[%c0_8, %c0_9] : memref<8x1xf32, #tpu.memory_space<vmem>>, vector<8x1xf32>
    tpu.vector_store %arg3[%c0_8, %c0_9], %27 {strides = array<i32>} : memref<8x1xf32, #tpu.memory_space<vmem>>, vector<8x1xf32>,
    return
  }
  func.func @transform_0(%arg0: i32) -> (i32, i32) {
    %c0_i32 = arith.constant 0 : i32
    %c0_i32_0 = arith.constant 0 : i32
    return %arg0, %c0_i32 : i32, i32
  }
  func.func @transform_1(%arg0: i32) -> (i32, i32) {
    %c0_i32 = arith.constant 0 : i32
    %c0_i32_0 = arith.constant 0 : i32
    return %arg0, %c0_i32 : i32, i32
  }
  func.func @transform_2(%arg0: i32) -> (i32, i32) {
    %c0_i32 = arith.constant 0 : i32
    %c0_i32_0 = arith.constant 0 : i32
    return %arg0, %c0_i32 : i32, i32
  }
}

</mosaic_0001>

<llo_original>
// kernel: tpu_custom_call.1
$region0: #{tpu_custom_call.1}
  #allocation0 [shape = 'u32[]', space=smem, size = 0x4, offset = 0x4, fixed_abs, tag = 'smem constant byte address 0x4 - core index']
  #allocation1 [shape = 'u32[144,128]{1,0:T(1,128)}', space=vmem, size = 0x12000, scoped, tag = 'internal scratch']
  %s0 = inlined_call_operand.hbm [shape: f32[13,256], index: 0, kind: input, shape index: {}]
  %s1 = inlined_call_operand.vmem [shape: s32[13,1], index: 1, kind: input, shape index: {}]
  %s2 = inlined_call_operand.vmem [shape: f32[13,1], index: 2, kind: output, shape index: {}]
  %s3 = sld [smem:[#allocation0]]
  $region45: #{tpu_custom_call.1} parent=0
    _
  %s5 = ssub.s32 1, %s3
  %s6 = scalar_select 0, %s5, %s3
  $region1: #{tpu_custom_call.1} parent=0
    #allocation2 [shape = 'u8[16384]{0}', space=vmem, size = 0x4000, scoped, tag = 'input window, operand 0']
    #allocation3 [shape = 's32[2]{0}', space=sflag, size = 0x8, scoped, tag = 'scoped memory for tpu_custom_call.1']
    %7 = vsyncpa [#allocation3], 0
    %s8 = scalar_lea.sflag [#allocation3], 1
    %9 = vsyncpa %s8, 0
    loop: start=0, step=1, limit=4
    $region2: #{tpu_custom_call.1} parent=1 // loop_pre_header
      _
    $region3: #{tpu_custom_call.1} parent=1 // loop_header
      %s11 = sphi 0, %s15
      %p12 = scmp.ge.s32.totalorder %s11, 4
      %s21 = sphi 0, %s23
      %s24 = sphi 0, %s21
      %s25 = sphi 0, %s24
      %s41 = sphi 0, %s25
      %s47 = sphi 0, %s49
      %s50 = sphi 0, %s47
      %s51 = sphi 0, %s50
      %s67 = sphi 0, %s51
      %s73 = sphi 0, %s75
      %s76 = sphi 0, %s73
      %s77 = sphi 0, %s76
      %s93 = sphi 0, %s77
    $region4: #{tpu_custom_call.1} parent=1 // loop_header_branch
      %14 = sbr.rel (%p12) target = $region8
    $region5: #{tpu_custom_call.1} parent=1 // loop_body
      %s16 = ssub.s32 %s11, 1
      %s17 = ssub.s32 %s11, 2
      %s18 = sadd.s32 %s11, 1
      %s19 = ssub.s32 %s11, %s18
      %p20 = scmp.eq.s32.totalorder %s19, 0
      %s22 = sadd.s32 %s21, 1
      %s23 = scalar_select %p20, %s21, %s22
      %p26 = pneg %p20
      %p27 = scmp.eq.s32.totalorder %s11, 1
      %p28 = por %p26, %p27
      %p29 = scmp.ne.s32.totalorder %s21, %s24
      %p30 = scmp.eq.s32.totalorder %s11, 0
      %p31 = por %p29, %p30
      %p32 = scmp.ne.s32.totalorder %s21, %s24
      %p33 = scmp.eq.s32.totalorder %s16, 1
      %p34 = por %p32, %p33
      %p35 = scmp.ne.s32.totalorder %s24, %s25
      %p36 = scmp.eq.s32.totalorder %s16, 0
      %p37 = por %p35, %p36
      %p38 = scmp.ne.s32.totalorder %s24, %s25
      %p39 = scmp.eq.s32.totalorder %s17, 1
      %p40 = por %p38, %p39
      %p42 = scmp.ne.s32.totalorder %s25, %s41
      %p43 = scmp.eq.s32.totalorder %s17, 0
      %p44 = por %p42, %p43
      %s45 = ssub.s32 %s11, %s18
      %p46 = scmp.eq.s32.totalorder %s45, 0
      %s48 = sadd.s32 %s47, 1
      %s49 = scalar_select %p46, %s47, %s48
      %p52 = pneg %p46
      %p53 = scmp.eq.s32.totalorder %s11, 1
      %p54 = por %p52, %p53
      %p55 = scmp.ne.s32.totalorder %s47, %s50
      %p56 = scmp.eq.s32.totalorder %s11, 0
      %p57 = por %p55, %p56
      %p58 = scmp.ne.s32.totalorder %s47, %s50
      %p59 = scmp.eq.s32.totalorder %s16, 1
      %p60 = por %p58, %p59
      %p61 = scmp.ne.s32.totalorder %s50, %s51
      %p62 = scmp.eq.s32.totalorder %s16, 0
      %p63 = por %p61, %p62
      %p64 = scmp.ne.s32.totalorder %s50, %s51
      %p65 = scmp.eq.s32.totalorder %s17, 1
      %p66 = por %p64, %p65
      %p68 = scmp.ne.s32.totalorder %s51, %s67
      %p69 = scmp.eq.s32.totalorder %s17, 0
      %p70 = por %p68, %p69
      %s71 = ssub.s32 %s11, %s18
      %p72 = scmp.eq.s32.totalorder %s71, 0
      %s74 = sadd.s32 %s73, 1
      %s75 = scalar_select %p72, %s73, %s74
      %p78 = pneg %p72
      %p79 = scmp.eq.s32.totalorder %s11, 1
      %p80 = por %p78, %p79
      %p81 = scmp.ne.s32.totalorder %s73, %s76
      %p82 = scmp.eq.s32.totalorder %s11, 0
      %p83 = por %p81, %p82
      %p84 = scmp.ne.s32.totalorder %s73, %s76
      %p85 = scmp.eq.s32.totalorder %s16, 1
      %p86 = por %p84, %p85
      %p87 = scmp.ne.s32.totalorder %s76, %s77
      %p88 = scmp.eq.s32.totalorder %s16, 0
      %p89 = por %p87, %p88
      %p90 = scmp.ne.s32.totalorder %s76, %s77
      %p91 = scmp.eq.s32.totalorder %s17, 1
      %p92 = por %p90, %p91
      %p94 = scmp.ne.s32.totalorder %s77, %s93
      %p95 = scmp.eq.s32.totalorder %s17, 0
      %p96 = por %p94, %p95
      %p97 = scmp.le.s32.totalorder 1, %s11
      %p98 = scmp.lt.s32.totalorder %s11, 3
      %p99 = pnand %p97, %p98
      %p100 = pneg %p99
      // Predicated region
      $region9: #{tpu_custom_call.1} parent=5 // pred_check
        _
      $region10: #{tpu_custom_call.1} parent=5 // pred_check_branch
        %102 = sbr.rel (%p99) target = $region12
      $region11: #{tpu_custom_call.1} parent=5 // pred_region
        %s103 = ssub.s32 %s11, 1
      $region12: #{tpu_custom_call.1} parent=5 // pred_fallthru
        _
      %p104 = scmp.lt.s32.totalorder %s11, 2
      // Predicated region
      $region13: #{tpu_custom_call.1} parent=5 // pred_check
        %p105 = pneg %p104
      $region14: #{tpu_custom_call.1} parent=5 // pred_check_branch
        %107 = sbr.rel (%p105) target = $region16
      $region15: #{tpu_custom_call.1} parent=5 // pred_region
        // Predicated region
        $region17: #{tpu_custom_call.1} parent=15 // pred_check
          %p108 = pneg %p31
        $region18: #{tpu_custom_call.1} parent=15 // pred_check_branch
          %110 = sbr.rel (%p108) target = $region20
        $region19: #{tpu_custom_call.1} parent=15 // pred_region
          %s111 = sand.u32 %s21, 1
          %s112 = scalar_lea.sflag [#allocation3], %s111
          %s113 = sand.u32 %s21, 1
          %s114 = smul.addr %s113, 16
          %s115 = scalar_lea.vmem [#allocation2], %s114
          %s117 = ssub.s32 256, 256
          %118 = vsyncadd %s112, %s117
          %s119 = smul.addr %s11, 2
          %s120 = smul.addr %s119, 128
          %s121 = scalar_lea.hbm %s0, %s120
          %s123 = sshll.u32 %s115, 4
          %s124 = int_to_ptr.vmem [resolvable:$true] %s123
          %126 = dma.hbm_to_vmem [thread:$0]  %s121, 256, %s124, %s112
        $region20: #{tpu_custom_call.1} parent=15 // pred_fallthru
          _
        // Predicated region
        $region21: #{tpu_custom_call.1} parent=15 // pred_check
          %p127 = pneg %p57
        $region22: #{tpu_custom_call.1} parent=15 // pred_check_branch
          %129 = sbr.rel (%p127) target = $region24
        $region23: #{tpu_custom_call.1} parent=15 // pred_region
          %p130 = scmp.lt.s32.totalorder %s11, 1
          %s131 = scalar_select %p130, %s11, 1
          %s132 = smul.addr %s131, 8
          %s133 = scalar_lea.vmem %s1, %s132
        $region24: #{tpu_custom_call.1} parent=15 // pred_fallthru
          _
      $region16: #{tpu_custom_call.1} parent=5 // pred_fallthru
        _
      %p134 = scmp.le.s32.totalorder 1, %s11
      %p135 = scmp.lt.s32.totalorder %s11, 3
      %p136 = pnand %p134, %p135
      %p137 = pneg %p136
      // Predicated region
      $region25: #{tpu_custom_call.1} parent=5 // pred_check
        _
      $region26: #{tpu_custom_call.1} parent=5 // pred_check_branch
        %139 = sbr.rel (%p136) target = $region28
      $region27: #{tpu_custom_call.1} parent=5 // pred_region
        %s140 = ssub.s32 %s11, 1
        %s141 = sand.u32 %s24, 1
        %s142 = scalar_lea.sflag [#allocation3], %s141
        %s143 = sand.u32 %s24, 1
        %s144 = smul.addr %s143, 16
        %s145 = scalar_lea.vmem [#allocation2], %s144
        // Predicated region
        $region29: #{tpu_custom_call.1} parent=27 // pred_check
          %p146 = pneg %p37
        $region30: #{tpu_custom_call.1} parent=27 // pred_check_branch
          %148 = sbr.rel (%p146) target = $region32
        $region31: #{tpu_custom_call.1} parent=27 // pred_region
          %149 = dma.done %s142, 256
        $region32: #{tpu_custom_call.1} parent=27 // pred_fallthru
          _
        %s150 = sand.u32 %s24, 1
        %s151 = scalar_lea.sflag [#allocation3], %s150
        %s152 = sand.u32 %s24, 1
        %s153 = smul.addr %s152, 16
        %s154 = scalar_lea.vmem [#allocation2], %s153
        %p155 = pneg %p37
        %p156 = pneg %p34
        %p157 = scmp.lt.s32.totalorder %s16, 1
        %s158 = scalar_select %p157, %s16, 1
        %s159 = smul.addr %s158, 8
        %s160 = scalar_lea.vmem %s1, %s159
        %p161 = pneg %p63
        %p162 = pneg %p60
        %p163 = pneg %p89
        %p164 = pneg %p86
        %p165 = scmp.lt.s32.totalorder %s16, 1
        %s166 = scalar_select %p165, %s16, 1
        %s167 = smul.addr %s166, 8
        %s168 = scalar_lea.vmem %s2, %s167
        %p169 = scmp.lt.s32.totalorder %s16, 1
        %s170 = scalar_select %p169, %s16, 1
        %s171 = smul.addr %s170, 8
        %s172 = scalar_lea.vmem %s1, %s171
        %p173 = scmp.lt.s32.totalorder %s16, 1
        %s174 = scalar_select %p173, %s16, 1
        %s175 = smul.addr %s174, 8
        %s176 = scalar_lea.vmem %s2, %s175
        %v177 = vld [vmem:[%s145] sm:$0xff]
        %v178 = vld [vmem:[%s145 + $0x8] sm:$0xff]
        %v179 = vld [vmem:[%s172] sm:$0xff]
        %v180 = vlaneseq
        %v181 = vand.u32 %v180, 127
        %v182 = vadd.s32 %v181, 128
        %183 = vset.pattern.permute.xlu0 0
        %184 = vperm.xlu0 %183, %v179
        %v185 = vpop.permute.xlu0 %184
        %vm186 = vcmp.eq.s32.totalorder %v181, %v185
        %vm187 = vcmp.eq.s32.totalorder %v182, %v185
        %v188 = vsel %vm186, 0.9, 0.0003937008
        %v189 = vsel %vm187, 0.9, 0.0003937008
        %v190 = vmul.f32 %v188, %v177
        %v191 = vmul.f32 %v189, %v178
        %v192 = vadd.f32 %v190, %v191
        %193 = vadd.xlane.f32.xlu0 %v192
        %v194 = vpop.xlane.xlu0 %193
        %v195 = vmul.f32 %v177, 0.0003937008
        %v196 = vsub.f32 %v194, %v195
        %s197 = smul.u32 %s16, 8
        %v198 = vlaneseq
        %v199 = vshrl.u32 %v198, 7
        %v200 = vstv %s197
        %v201 = vadd.s32 %v200, %v199
        %vm202 = vcmp.lt.s32.totalorder %v201, 13
        %vm203 = vcmp.ne.s32.totalorder %v179, 0
        %vm204 = vmand %vm202, %vm203
        %v205 = vsub.f32 -0.8788164, %v196
        %v206 = vsel %vm204, %v205, 0.0
        %vm207 = vcmask 7168
        %208 = vst.msk [vmem:[%s176] sm:$0xff] %vm207, %v206
        %p209 = scmp.lt.s32.totalorder %s16, 1
        %s210 = scalar_select %p209, %s16, 1
        %s211 = smul.addr %s210, 8
        %s212 = scalar_lea.vmem %s2, %s211
        // Predicated region
        $region33: #{tpu_custom_call.1} parent=27 // pred_check
          %p213 = pneg %p86
        $region34: #{tpu_custom_call.1} parent=27 // pred_check_branch
          %215 = sbr.rel (%p213) target = $region36
        $region35: #{tpu_custom_call.1} parent=27 // pred_region
          _
        $region36: #{tpu_custom_call.1} parent=27 // pred_fallthru
          _
      $region28: #{tpu_custom_call.1} parent=5 // pred_fallthru
        _
      %p216 = scmp.le.s32.totalorder 2, %s11
      // Predicated region
      $region37: #{tpu_custom_call.1} parent=5 // pred_check
        %p217 = pneg %p216
      $region38: #{tpu_custom_call.1} parent=5 // pred_check_branch
        %219 = sbr.rel (%p217) target = $region40
      $region39: #{tpu_custom_call.1} parent=5 // pred_region
        %s220 = ssub.s32 %s11, 2
        // Predicated region
        $region41: #{tpu_custom_call.1} parent=39 // pred_check
          %p221 = pneg %p92
        $region42: #{tpu_custom_call.1} parent=39 // pred_check_branch
          %223 = sbr.rel (%p221) target = $region44
        $region43: #{tpu_custom_call.1} parent=39 // pred_region
          %p224 = scmp.lt.s32.totalorder %s17, 1
          %s225 = scalar_select %p224, %s17, 1
          %s226 = smul.addr %s225, 8
          %s227 = scalar_lea.vmem %s2, %s226
        $region44: #{tpu_custom_call.1} parent=39 // pred_fallthru
          _
      $region40: #{tpu_custom_call.1} parent=5 // pred_fallthru
        _
    $region6: #{tpu_custom_call.1} parent=1 // loop_footer
      %s15 = sadd.s32 1, %s11
    $region7: #{tpu_custom_call.1} parent=1 // loop_footer_branch
      %10 = sbr.rel target = $region3
    $region8: #{tpu_custom_call.1} parent=1 // loop_exit
      _
    %228 = vsyncpa [#allocation3], 1
    %s229 = scalar_lea.sflag [#allocation3], 1
    %230 = vsyncpa %s229, 1

</llo_original>
